<compile_context>
chip_gen: v6e
topology: v6e:2x2x1
jax: 0.10.0
libtpu: 0.0.40
codegen_flags: <defaults>
</compile_context>

<pallas_src>
import numpy as np
import jax
import jax.numpy as jnp
from jax.experimental import pallas as pl
from jax.experimental.pallas import tpu as pltpu

LANE = 128


def _round_up(n, m):
    return ((n + m - 1) // m) * m


# ----------------------------------------------------------------------------
# State-space matrices (LTI system discretized with zero-order hold).
# Exact ZOH via matrix exponential of the block matrix [[A, B], [0, 0]] * dt.
# ----------------------------------------------------------------------------
def state_space_matrices(memory_size: int, theta: float):
    Q = np.arange(memory_size, dtype=np.float64).reshape(-1, 1)
    R = (2 * Q + 1) / theta
    i, j = np.meshgrid(Q, Q, indexing="ij")
    A = R * np.where(i < j, -1.0, (-1.0) ** (i - j + 1))   # [M, M]
    B = R * (-1.0) ** Q                                    # [M, 1]

    M = memory_size
    blk = np.zeros((M + 1, M + 1), dtype=np.float64)
    blk[:M, :M] = A
    blk[:M, M:] = B
    blk_d = jax.scipy.linalg.expm(jnp.asarray(blk, dtype=jnp.float32))
    Ad = np.asarray(blk_d[:M, :M], dtype=np.float32)
    Bd = np.asarray(blk_d[:M, M:], dtype=np.float32)
    return Ad, Bd


# ----------------------------------------------------------------------------
# Deterministic parameter init (mirrors LMUCell.initParameters shapes/schemes).
# ----------------------------------------------------------------------------
def init_params(key, input_size, hidden_size, memory_size, theta):
    k_ex, k_eh, k_wx, k_wh, k_wm = jax.random.split(key, 5)

    def lecun_uniform(k, shape):
        fan_in = shape[1]
        limit = np.sqrt(3.0 / fan_in)
        return jax.random.uniform(k, shape, jnp.float32, -limit, limit)

    def xavier_normal(k, shape):
        fan_out, fan_in = shape
        std = np.sqrt(2.0 / (fan_in + fan_out))
        return std * jax.random.normal(k, shape, jnp.float32)

    A, B = state_space_matrices(memory_size, theta)
    return {
        "A": jnp.asarray(A),                                    # [M, M]
        "B": jnp.asarray(B),                                    # [M, 1]
        "e_x": lecun_uniform(k_ex, (1, input_size)),            # [1, I]
        "e_h": lecun_uniform(k_eh, (1, hidden_size)),           # [1, H]
        "e_m": jnp.zeros((1, memory_size), jnp.float32),        # [1, M]
        "W_x": xavier_normal(k_wx, (hidden_size, input_size)),  # [H, I]
        "W_h": xavier_normal(k_wh, (hidden_size, hidden_size)), # [H, H]
        "W_m": xavier_normal(k_wm, (hidden_size, memory_size)), # [H, M]
    }


# ----------------------------------------------------------------------------
# Host-side weight folding:   u = x e_x^T + h e_h^T + m e_m^T is never formed;
#   m_new = x @ Gx + h @ Gh + m @ Gm
#       Gx = e_x^T B^T, Gh = e_h^T B^T, Gm = A^T + e_m^T B^T
#   h_new = tanh(x @ Px + h @ Ph + m_new @ Pm)
#       Px = W_x^T, Ph = W_h^T, Pm = W_m^T
# All matrices zero-padded so output lanes (H, M) are multiples of 128.
# ----------------------------------------------------------------------------
def fold_params(params):
    e_x, e_h, e_m = params["e_x"], params["e_h"], params["e_m"]
    A, B = params["A"], params["B"]
    W_x, W_h, W_m = params["W_x"], params["W_h"], params["W_m"]

    I = e_x.shape[1]
    H = e_h.shape[1]
    M = e_m.shape[1]
    Hp = _round_up(H, LANE)
    Mp = _round_up(M, LANE)

    b = B[:, 0]
    Gx = jnp.outer(e_x[0], b)            # [I, M]
    Gh = jnp.outer(e_h[0], b)            # [H, M]
    Gm = A.T + jnp.outer(e_m[0], b)      # [M, M]
    Px, Ph, Pm = W_x.T, W_h.T, W_m.T     # [I, H], [H, H], [M, H]

    def pad2(a, r, c):
        return jnp.pad(a, ((0, r - a.shape[0]), (0, c - a.shape[1])))

    return {
        "Gx": pad2(Gx, I, Mp), "Gh": pad2(Gh, Hp, Mp), "Gm": pad2(Gm, Mp, Mp),
        "Px": pad2(Px, I, Hp), "Ph": pad2(Ph, Hp, Hp), "Pm": pad2(Pm, Mp, Hp),
        "H": H, "M": M, "Hp": Hp, "Mp": Mp,
    }


# ----------------------------------------------------------------------------
# Pallas kernel: T LMU-cell steps; h/m carried in VMEM scratch, weights
# resident, one x_t tile streamed per grid step, lane-dense per-step outputs.
# ----------------------------------------------------------------------------
def lmu_seq_kernel(x_ref, h0_ref, m0_ref,
                   Gx_ref, Gh_ref, Gm_ref, Px_ref, Ph_ref, Pm_ref,
                   h_out_ref, m_out_ref,
                   h_scr, m_scr):
    t = pl.program_id(0)

    @pl.when(t == 0)
    def _():
        h_scr[...] = h0_ref[...]
        m_scr[...] = m0_ref[...]

    x = x_ref[0]          # [B, I]
    h = h_scr[...]        # [B, Hp]
    m = m_scr[...]        # [B, Mp]
    f32 = jnp.float32

    # m_new = x @ Gx + h @ Gh + m @ Gm   (u and u @ B^T folded into G*)
    m_new = (jnp.dot(x, Gx_ref[...], preferred_element_type=f32)
             + jnp.dot(h, Gh_ref[...], preferred_element_type=f32)
             + jnp.dot(m, Gm_ref[...], preferred_element_type=f32))

    # h_new = tanh(x @ W_x^T + h @ W_h^T + m_new @ W_m^T)
    h_new = jnp.tanh(
        jnp.dot(x, Px_ref[...], preferred_element_type=f32)
        + jnp.dot(h, Ph_ref[...], preferred_element_type=f32)
        + jnp.dot(m_new, Pm_ref[...], preferred_element_type=f32))

    h_scr[...] = h_new
    m_scr[...] = m_new
    h_out_ref[0] = h_new
    m_out_ref[0] = m_new


def lmu_sequence_forward(x_seq, h0, m0, params):
    """x_seq: [T, B, I]; h0: [B, H]; m0: [B, M] -> (h_seq [T,B,H], m_seq [T,B,M])."""
    T, Bt, I = x_seq.shape
    folded = fold_params(params)
    H, M, Hp, Mp = folded["H"], folded["M"], folded["Hp"], folded["Mp"]

    h0_p = jnp.pad(h0, ((0, 0), (0, Hp - H)))
    m0_p = jnp.pad(m0, ((0, 0), (0, Mp - M)))

    const = lambda t: (0, 0)   # weights / initial state: same block every step
    grid_spec = pltpu.PrefetchScalarGridSpec(
        num_scalar_prefetch=0,
        grid=(T,),
        in_specs=[
            pl.BlockSpec((1, Bt, I), lambda t: (t, 0, 0)),   # x_t streamed
            pl.BlockSpec((Bt, Hp), const),                   # h0 (t==0 only)
            pl.BlockSpec((Bt, Mp), const),                   # m0 (t==0 only)
            pl.BlockSpec((I, Mp), const),                    # Gx
            pl.BlockSpec((Hp, Mp), const),                   # Gh
            pl.BlockSpec((Mp, Mp), const),                   # Gm
            pl.BlockSpec((I, Hp), const),                    # Px
            pl.BlockSpec((Hp, Hp), const),                   # Ph
            pl.BlockSpec((Mp, Hp), const),                   # Pm
        ],
        out_specs=[
            pl.BlockSpec((1, Bt, Hp), lambda t: (t, 0, 0)),  # lane-dense h slab
            pl.BlockSpec((1, Bt, Mp), lambda t: (t, 0, 0)),  # lane-dense m slab
        ],
        scratch_shapes=[
            pltpu.VMEM((Bt, Hp), jnp.float32),               # carried h state
            pltpu.VMEM((Bt, Mp), jnp.float32),               # carried m state
        ],
    )
    h_seq_p, m_seq_p = pl.pallas_call(
        lmu_seq_kernel,
        out_shape=(jax.ShapeDtypeStruct((T, Bt, Hp), jnp.float32),
                   jax.ShapeDtypeStruct((T, Bt, Mp), jnp.float32)),
        grid_spec=grid_spec,
        compiler_params=pltpu.CompilerParams(
            dimension_semantics=("arbitrary",)),  # sequential recurrence
    )(x_seq, h0_p, m0_p,
      folded["Gx"], folded["Gh"], folded["Gm"],
      folded["Px"], folded["Ph"], folded["Pm"])

    return h_seq_p[:, :, :H], m_seq_p[:, :, :M]


def lmu_cell_forward(x, h, m, params):
    """Single-step LMUCell.forward (same semantics as the PyTorch module)."""
    h_seq, m_seq = lmu_sequence_forward(x[None], h, m, params)
    return h_seq[0], m_seq[0]


# ----------------------------------------------------------------------------
# Pure-JAX references (mirror the PyTorch forward exactly, un-folded).
# ----------------------------------------------------------------------------
def lmu_cell_ref(x, h, m, p):
    hi = jax.lax.Precision.HIGHEST
    u = (jnp.dot(x, p["e_x"].T, precision=hi)
         + jnp.dot(h, p["e_h"].T, precision=hi)
         + jnp.dot(m, p["e_m"].T, precision=hi))
    m_new = jnp.dot(m, p["A"].T, precision=hi) + jnp.dot(u, p["B"].T, precision=hi)
    h_new = jnp.tanh(jnp.dot(x, p["W_x"].T, precision=hi)
                     + jnp.dot(h, p["W_h"].T, precision=hi)
                     + jnp.dot(m_new, p["W_m"].T, precision=hi))
    return h_new, m_new


def lmu_sequence_ref(x_seq, h0, m0, p):
    def step(carry, x):
        h, m = lmu_cell_ref(x, carry[0], carry[1], p)
        return (h, m), (h, m)
    _, (hs, ms) = jax.lax.scan(step, (h0, m0), x_seq)
    return hs, ms


if __name__ == "__main__":
    seq_len = 8
    batch = 8
    input_size = 16
    hidden_size = 32
    memory_size = 32
    theta = 8

    key = jax.random.PRNGKey(0)
    k_p, k_x, k_h, k_m = jax.random.split(key, 4)

    params = init_params(k_p, input_size, hidden_size, memory_size, theta)
    x_seq = jax.random.normal(k_x, (seq_len, batch, input_size), jnp.float32)
    h0 = jax.random.normal(k_h, (batch, hidden_size), jnp.float32)
    m0 = jax.random.normal(k_m, (batch, memory_size), jnp.float32)

    # Fused-sequence kernel vs. scanned reference.
    h_seq, m_seq = lmu_sequence_forward(x_seq, h0, m0, params)
    jax.block_until_ready((h_seq, m_seq))
    h_ref, m_ref = lmu_sequence_ref(x_seq, h0, m0, params)
    np.testing.assert_allclose(np.asarray(h_seq), np.asarray(h_ref), rtol=1e-4, atol=1e-4)
    np.testing.assert_allclose(np.asarray(m_seq), np.asarray(m_ref), rtol=1e-4, atol=1e-4)

    # Single-step path (original LMUCell.forward semantics).
    h1, m1 = lmu_cell_forward(x_seq[0], h0, m0, params)
    jax.block_until_ready((h1, m1))
    h1_ref, m1_ref = lmu_cell_ref(x_seq[0], h0, m0, params)
    np.testing.assert_allclose(np.asarray(h1), np.asarray(h1_ref), rtol=1e-4, atol=1e-4)
    np.testing.assert_allclose(np.asarray(m1), np.asarray(m1_ref), rtol=1e-4, atol=1e-4)

    print("KERNEL_OK")
</pallas_src>

<mosaic_0001>
module attributes {stable_mosaic.version = 11 : i64} {
  func.func @lmu_seq_kernel(%arg0: i32, %arg1: memref<1x8x16xf32, #tpu.memory_space<vmem>>, %arg2: memref<8x128xf32, #tpu.memory_space<vmem>>, %arg3: memref<8x128xf32, #tpu.memory_space<vmem>>, %arg4: memref<16x128xf32, #tpu.memory_space<vmem>>, %arg5: memref<128x128xf32, #tpu.memory_space<vmem>>, %arg6: memref<128x128xf32, #tpu.memory_space<vmem>>, %arg7: memref<16x128xf32, #tpu.memory_space<vmem>>, %arg8: memref<128x128xf32, #tpu.memory_space<vmem>>, %arg9: memref<128x128xf32, #tpu.memory_space<vmem>>, %arg10: memref<1x8x128xf32, #tpu.memory_space<vmem>>, %arg11: memref<1x8x128xf32, #tpu.memory_space<vmem>>, %arg12: memref<8x128xf32, #tpu.memory_space<vmem>>, %arg13: memref<8x128xf32, #tpu.memory_space<vmem>>) attributes {dimension_semantics = [#tpu.dimension_semantics<arbitrary>], iteration_bounds = array<i64: 8>, scalar_prefetch = 0 : i64, scratch_operands = 2 : i64, tpu.core_type = #tpu.core_type<tc>, window_params = [{transform_indices = @transform_0, window_bounds = array<i64: 1, 8, 16>}, {pipeline_mode = #tpu.pipeline_mode<synchronous>, transform_indices = @transform_1, window_bounds = array<i64: 8, 128>}, {pipeline_mode = #tpu.pipeline_mode<synchronous>, transform_indices = @transform_2, window_bounds = array<i64: 8, 128>}, {pipeline_mode = #tpu.pipeline_mode<synchronous>, transform_indices = @transform_3, window_bounds = array<i64: 16, 128>}, {pipeline_mode = #tpu.pipeline_mode<synchronous>, transform_indices = @transform_4, window_bounds = array<i64: 128, 128>}, {pipeline_mode = #tpu.pipeline_mode<synchronous>, transform_indices = @transform_5, window_bounds = array<i64: 128, 128>}, {pipeline_mode = #tpu.pipeline_mode<synchronous>, transform_indices = @transform_6, window_bounds = array<i64: 16, 128>}, {pipeline_mode = #tpu.pipeline_mode<synchronous>, transform_indices = @transform_7, window_bounds = array<i64: 128, 128>}, {pipeline_mode = #tpu.pipeline_mode<synchronous>, transform_indices = @transform_8, window_bounds = array<i64: 128, 128>}, {transform_indices = @transform_9, window_bounds = array<i64: 1, 8, 128>}, {transform_indices = @transform_10, window_bounds = array<i64: 1, 8, 128>}]} {
    %c0_i32 = arith.constant 0 : i32
    %0 = arith.cmpi eq, %arg0, %c0_i32 : i32
    %1 = arith.extui %0 : i1 to i32
    %c0_i32_0 = arith.constant 0 : i32
    %2 = arith.cmpi ne, %1, %c0_i32_0 : i32
    scf.if %2 {
      %c0_34 = arith.constant 0 : index
      %c0_35 = arith.constant 0 : index
      %32 = vector.load %arg2[%c0_34, %c0_35] : memref<8x128xf32, #tpu.memory_space<vmem>>, vector<8x128xf32>
      %c0_36 = arith.constant 0 : index
      %c0_37 = arith.constant 0 : index
      %33 = vector.load %arg12[%c0_36, %c0_37] : memref<8x128xf32, #tpu.memory_space<vmem>>, vector<8x128xf32>
      tpu.vector_store %arg12[%c0_36, %c0_37], %32 {strides = array<i32>} : memref<8x128xf32, #tpu.memory_space<vmem>>, vector<8x128xf32>,
      %c0_38 = arith.constant 0 : index
      %c0_39 = arith.constant 0 : index
      %34 = vector.load %arg3[%c0_38, %c0_39] : memref<8x128xf32, #tpu.memory_space<vmem>>, vector<8x128xf32>
      %c0_40 = arith.constant 0 : index
      %c0_41 = arith.constant 0 : index
      %35 = vector.load %arg13[%c0_40, %c0_41] : memref<8x128xf32, #tpu.memory_space<vmem>>, vector<8x128xf32>
      tpu.vector_store %arg13[%c0_40, %c0_41], %34 {strides = array<i32>} : memref<8x128xf32, #tpu.memory_space<vmem>>, vector<8x128xf32>,
    } else {
    }
    %c0 = arith.constant 0 : index
    %c0_1 = arith.constant 0 : index
    %c0_2 = arith.constant 0 : index
    %3 = vector.load %arg1[%c0, %c0_1, %c0_2] : memref<1x8x16xf32, #tpu.memory_space<vmem>>, vector<1x8x16xf32>
    %4 = vector.shape_cast %3 : vector<1x8x16xf32> to vector<8x16xf32>
    %c0_3 = arith.constant 0 : index
    %c0_4 = arith.constant 0 : index
    %5 = vector.load %arg12[%c0_3, %c0_4] : memref<8x128xf32, #tpu.memory_space<vmem>>, vector<8x128xf32>
    %c0_5 = arith.constant 0 : index
    %c0_6 = arith.constant 0 : index
    %6 = vector.load %arg13[%c0_5, %c0_6] : memref<8x128xf32, #tpu.memory_space<vmem>>, vector<8x128xf32>
    %c0_7 = arith.constant 0 : index
    %c0_8 = arith.constant 0 : index
    %7 = vector.load %arg4[%c0_7, %c0_8] : memref<16x128xf32, #tpu.memory_space<vmem>>, vector<16x128xf32>
    %cst = arith.constant dense<0.000000e+00> : vector<8x128xf32>
    %8 = tpu.matmul %4, %7, %cst {dimension_numbers = #tpu.dot_dimension_numbers<[1], [0], [0], [1], [0, 0, 1, 1], [], []>} : vector<8x16xf32>, vector<16x128xf32>, vector<8x128xf32> -> vector<8x128xf32>
    %c0_9 = arith.constant 0 : index
    %c0_10 = arith.constant 0 : index
    %9 = vector.load %arg5[%c0_9, %c0_10] : memref<128x128xf32, #tpu.memory_space<vmem>>, vector<128x128xf32>
    %cst_11 = arith.constant dense<0.000000e+00> : vector<8x128xf32>
    %10 = tpu.matmul %5, %9, %cst_11 {dimension_numbers = #tpu.dot_dimension_numbers<[1], [0], [0], [1], [0, 0, 1, 1], [], []>} : vector<8x128xf32>, vector<128x128xf32>, vector<8x128xf32> -> vector<8x128xf32>
    %11 = arith.addf %8, %10 : vector<8x128xf32>
    %c0_12 = arith.constant 0 : index
    %c0_13 = arith.constant 0 : index
    %12 = vector.load %arg6[%c0_12, %c0_13] : memref<128x128xf32, #tpu.memory_space<vmem>>, vector<128x128xf32>
    %cst_14 = arith.constant dense<0.000000e+00> : vector<8x128xf32>
    %13 = tpu.matmul %6, %12, %cst_14 {dimension_numbers = #tpu.dot_dimension_numbers<[1], [0], [0], [1], [0, 0, 1, 1], [], []>} : vector<8x128xf32>, vector<128x128xf32>, vector<8x128xf32> -> vector<8x128xf32>
    %14 = arith.addf %11, %13 : vector<8x128xf32>
    %c0_15 = arith.constant 0 : index
    %c0_16 = arith.constant 0 : index
    %15 = vector.load %arg7[%c0_15, %c0_16] : memref<16x128xf32, #tpu.memory_space<vmem>>, vector<16x128xf32>
    %cst_17 = arith.constant dense<0.000000e+00> : vector<8x128xf32>
    %16 = tpu.matmul %4, %15, %cst_17 {dimension_numbers = #tpu.dot_dimension_numbers<[1], [0], [0], [1], [0, 0, 1, 1], [], []>} : vector<8x16xf32>, vector<16x128xf32>, vector<8x128xf32> -> vector<8x128xf32>
    %c0_18 = arith.constant 0 : index
    %c0_19 = arith.constant 0 : index
    %17 = vector.load %arg8[%c0_18, %c0_19] : memref<128x128xf32, #tpu.memory_space<vmem>>, vector<128x128xf32>
    %cst_20 = arith.constant dense<0.000000e+00> : vector<8x128xf32>
    %18 = tpu.matmul %5, %17, %cst_20 {dimension_numbers = #tpu.dot_dimension_numbers<[1], [0], [0], [1], [0, 0, 1, 1], [], []>} : vector<8x128xf32>, vector<128x128xf32>, vector<8x128xf32> -> vector<8x128xf32>
    %19 = arith.addf %16, %18 : vector<8x128xf32>
    %c0_21 = arith.constant 0 : index
    %c0_22 = arith.constant 0 : index
    %20 = vector.load %arg9[%c0_21, %c0_22] : memref<128x128xf32, #tpu.memory_space<vmem>>, vector<128x128xf32>
    %cst_23 = arith.constant dense<0.000000e+00> : vector<8x128xf32>
    %21 = tpu.matmul %14, %20, %cst_23 {dimension_numbers = #tpu.dot_dimension_numbers<[1], [0], [0], [1], [0, 0, 1, 1], [], []>} : vector<8x128xf32>, vector<128x128xf32>, vector<8x128xf32> -> vector<8x128xf32>
    %22 = arith.addf %19, %21 : vector<8x128xf32>
    %23 = math.tanh %22 : vector<8x128xf32>
    %c0_24 = arith.constant 0 : index
    %c0_25 = arith.constant 0 : index
    %24 = vector.load %arg12[%c0_24, %c0_25] : memref<8x128xf32, #tpu.memory_space<vmem>>, vector<8x128xf32>
    tpu.vector_store %arg12[%c0_24, %c0_25], %23 {strides = array<i32>} : memref<8x128xf32, #tpu.memory_space<vmem>>, vector<8x128xf32>,
    %c0_26 = arith.constant 0 : index
    %c0_27 = arith.constant 0 : index
    %25 = vector.load %arg13[%c0_26, %c0_27] : memref<8x128xf32, #tpu.memory_space<vmem>>, vector<8x128xf32>
    tpu.vector_store %arg13[%c0_26, %c0_27], %14 {strides = array<i32>} : memref<8x128xf32, #tpu.memory_space<vmem>>, vector<8x128xf32>,
    %c0_28 = arith.constant 0 : index
    %c0_29 = arith.constant 0 : index
    %c0_30 = arith.constant 0 : index
    %26 = vector.load %arg10[%c0_28, %c0_29, %c0_30] : memref<1x8x128xf32, #tpu.memory_space<vmem>>, vector<1x8x128xf32>
    %27 = vector.shape_cast %26 : vector<1x8x128xf32> to vector<8x128xf32>
    %28 = vector.shape_cast %23 : vector<8x128xf32> to vector<1x8x128xf32>
    tpu.vector_store %arg10[%c0_28, %c0_29, %c0_30], %28 {strides = array<i32>} : memref<1x8x128xf32, #tpu.memory_space<vmem>>, vector<1x8x128xf32>,
    %c0_31 = arith.constant 0 : index
    %c0_32 = arith.constant 0 : index
    %c0_33 = arith.constant 0 : index
    %29 = vector.load %arg11[%c0_31, %c0_32, %c0_33] : memref<1x8x128xf32, #tpu.memory_space<vmem>>, vector<1x8x128xf32>
    %30 = vector.shape_cast %29 : vector<1x8x128xf32> to vector<8x128xf32>
    %31 = vector.shape_cast %14 : vector<8x128xf32> to vector<1x8x128xf32>
    tpu.vector_store %arg11[%c0_31, %c0_32, %c0_33], %31 {strides = array<i32>} : memref<1x8x128xf32, #tpu.memory_space<vmem>>, vector<1x8x128xf32>,
    return
  }
  func.func @transform_0(%arg0: i32) -> (i32, i32, i32) {
    %c0_i32 = arith.constant 0 : i32
    %c0_i32_0 = arith.constant 0 : i32
    %c0_i32_1 = arith.constant 0 : i32
    return %arg0, %c0_i32, %c0_i32_0 : i32, i32, i32
  }
  func.func @transform_1(%arg0: i32) -> (i32, i32) {
    %c0_i32 = arith.constant 0 : i32
    %c0_i32_0 = arith.constant 0 : i32
    %c0_i32_1 = arith.constant 0 : i32
    return %c0_i32, %c0_i32_0 : i32, i32
  }
  func.func @transform_2(%arg0: i32) -> (i32, i32) {
    %c0_i32 = arith.constant 0 : i32
    %c0_i32_0 = arith.constant 0 : i32
    %c0_i32_1 = arith.constant 0 : i32
    return %c0_i32, %c0_i32_0 : i32, i32
  }
  func.func @transform_3(%arg0: i32) -> (i32, i32) {
    %c0_i32 = arith.constant 0 : i32
    %c0_i32_0 = arith.constant 0 : i32
    %c0_i32_1 = arith.constant 0 : i32
    return %c0_i32, %c0_i32_0 : i32, i32
  }
  func.func @transform_4(%arg0: i32) -> (i32, i32) {
    %c0_i32 = arith.constant 0 : i32
    %c0_i32_0 = arith.constant 0 : i32
    %c0_i32_1 = arith.constant 0 : i32
    return %c0_i32, %c0_i32_0 : i32, i32
  }
  func.func @transform_5(%arg0: i32) -> (i32, i32) {
    %c0_i32 = arith.constant 0 : i32
    %c0_i32_0 = arith.constant 0 : i32
    %c0_i32_1 = arith.constant 0 : i32
    return %c0_i32, %c0_i32_0 : i32, i32
  }
  func.func @transform_6(%arg0: i32) -> (i32, i32) {
    %c0_i32 = arith.constant 0 : i32
    %c0_i32_0 = arith.constant 0 : i32
    %c0_i32_1 = arith.constant 0 : i32
    return %c0_i32, %c0_i32_0 : i32, i32
  }
  func.func @transform_7(%arg0: i32) -> (i32, i32) {
    %c0_i32 = arith.constant 0 : i32
    %c0_i32_0 = arith.constant 0 : i32
    %c0_i32_1 = arith.constant 0 : i32
    return %c0_i32, %c0_i32_0 : i32, i32
  }
  func.func @transform_8(%arg0: i32) -> (i32, i32) {
    %c0_i32 = arith.constant 0 : i32
    %c0_i32_0 = arith.constant 0 : i32
    %c0_i32_1 = arith.constant 0 : i32
    return %c0_i32, %c0_i32_0 : i32, i32
  }
  func.func @transform_9(%arg0: i32) -> (i32, i32, i32) {
    %c0_i32 = arith.constant 0 : i32
    %c0_i32_0 = arith.constant 0 : i32
    %c0_i32_1 = arith.constant 0 : i32
    return %arg0, %c0_i32, %c0_i32_0 : i32, i32, i32
  }
  func.func @transform_10(%arg0: i32) -> (i32, i32, i32) {
    %c0_i32 = arith.constant 0 : i32
    %c0_i32_0 = arith.constant 0 : i32
    %c0_i32_1 = arith.constant 0 : i32
    return %arg0, %c0_i32, %c0_i32_0 : i32, i32, i32
  }
}

</mosaic_0001>

<llo_original>
// kernel: tpu_custom_call.1
$region0: #{tpu_custom_call.1}
  #allocation0 [shape = 'u32[]', space=smem, size = 0x4, offset = 0x4, fixed_abs, tag = 'smem constant byte address 0x4 - core index']
  #allocation1 [shape = 'u32[144,128]{1,0:T(1,128)}', space=vmem, size = 0x12000, scoped, tag = 'internal scratch']
  #allocation2 [shape = 'f32[8,128]{1,0:T(8,128)}', space=vmem, size = 0x1000, scoped, tag = 'scratch operand']
  #allocation3 [shape = 'f32[8,128]{1,0:T(8,128)}', space=vmem, size = 0x1000, scoped, tag = 'scratch operand']
  %s0 = inlined_call_operand.hbm [shape: f32[8,8,16], index: 0, kind: input, shape index: {}]
  %s1 = inlined_call_operand.hbm [shape: f32[8,128], index: 1, kind: input, shape index: {}]
  %s2 = inlined_call_operand.hbm [shape: f32[8,128], index: 2, kind: input, shape index: {}]
  %s3 = inlined_call_operand.hbm [shape: f32[16,128], index: 3, kind: input, shape index: {}]
  %s4 = inlined_call_operand.hbm [shape: f32[128,128], index: 4, kind: input, shape index: {}]
  %s5 = inlined_call_operand.hbm [shape: f32[128,128], index: 5, kind: input, shape index: {}]
  %s6 = inlined_call_operand.hbm [shape: f32[16,128], index: 6, kind: input, shape index: {}]
  %s7 = inlined_call_operand.hbm [shape: f32[128,128], index: 7, kind: input, shape index: {}]
  %s8 = inlined_call_operand.hbm [shape: f32[128,128], index: 8, kind: input, shape index: {}]
  %s9 = inlined_call_operand.hbm [shape: f32[8,8,128], index: 9, kind: output, shape index: {0}]
  %s10 = inlined_call_operand.hbm [shape: f32[8,8,128], index: 10, kind: output, shape index: {1}]
  %11 = xla_tuple %s9, %s10
  %s12 = sld [smem:[#allocation0]]
  $region117: #{tpu_custom_call.1} parent=0
    _
  %s14 = ssub.s32 1, %s12
  %s15 = scalar_select 0, %s14, %s12
  $region1: #{tpu_custom_call.1} parent=0
    #allocation4 [shape = 'u8[8192]{0}', space=vmem, size = 0x2000, scoped, tag = 'input window, operand 0']
    #allocation5 [shape = 's32[2]{0}', space=sflag, size = 0x8, scoped, tag = 'scoped memory for tpu_custom_call.1']
    #allocation6 [shape = 's32[2]{0}', space=sflag, size = 0x8, scoped, tag = 'scoped memory for tpu_custom_call.1']
    #allocation7 [shape = 'u8[4096]{0}', space=vmem, size = 0x1000, scoped, tag = 'input window, operand 1, single buffered']
    #allocation8 [shape = 's32[1]{0}', space=sflag, size = 0x4, scoped, tag = 'scoped memory for tpu_custom_call.1']
    #allocation9 [shape = 'u8[4096]{0}', space=vmem, size = 0x1000, scoped, tag = 'input window, operand 2, single buffered']
    #allocation10 [shape = 'u8[8192]{0}', space=vmem, size = 0x2000, scoped, tag = 'input window, operand 3, single buffered']
    #allocation11 [shape = 's32[1]{0}', space=sflag, size = 0x4, scoped, tag = 'scoped memory for tpu_custom_call.1']
    #allocation12 [shape = 'u8[65536]{0}', space=vmem, size = 0x10000, scoped, tag = 'input window, operand 4, single buffered']
    #allocation13 [shape = 'u8[65536]{0}', space=vmem, size = 0x10000, scoped, tag = 'input window, operand 5, single buffered']
    #allocation14 [shape = 's32[1]{0}', space=sflag, size = 0x4, scoped, tag = 'scoped memory for tpu_custom_call.1']
    #allocation15 [shape = 'u8[8192]{0}', space=vmem, size = 0x2000, scoped, tag = 'input window, operand 6, single buffered']
    #allocation16 [shape = 'u8[65536]{0}', space=vmem, size = 0x10000, scoped, tag = 'input window, operand 7, single buffered']
    #allocation17 [shape = 's32[1]{0}', space=sflag, size = 0x4, scoped, tag = 'scoped memory for tpu_custom_call.1']
    #allocation18 [shape = 'u8[65536]{0}', space=vmem, size = 0x10000, scoped, tag = 'input window, operand 8, single buffered']
    #allocation19 [shape = 'u8[8192]{0}', space=vmem, size = 0x2000, scoped, tag = 'output window, operand 0']
    #allocation20 [shape = 'u8[8192]{0}', space=vmem, size = 0x2000, scoped, tag = 'output window, operand 1']
    #allocation21 [shape = 's32[2]{0}', space=sflag, size = 0x8, scoped, tag = 'scoped memory for tpu_custom_call.1']
    %16 = vsyncpa [#allocation5], 0
    %s17 = scalar_lea.sflag [#allocation5], 1
    %18 = vsyncpa %s17, 0
    %19 = vsyncpa [#allocation8], 0
    %20 = vsyncpa [#allocation11], 0
    %21 = vsyncpa [#allocation14], 0
    %22 = vsyncpa [#allocation17], 0
    %23 = vsyncpa [#allocation6], 0
    %s24 = scalar_lea.sflag [#allocation6], 1
    %25 = vsyncpa %s24, 0
    %26 = vsyncpa [#allocation21], 0
    %s27 = scalar_lea.sflag [#allocation21], 1
    %28 = vsyncpa %s27, 0
    loop: start=0, step=1, limit=10
    $region2: #{tpu_custom_call.1} parent=1 // loop_pre_header
      _
    $region3: #{tpu_custom_call.1} parent=1 // loop_header
      %s30 = sphi 0, %s34
      %p31 = scmp.ge.s32.totalorder %s30, 10
      %s40 = sphi 0, %s42
      %s43 = sphi 0, %s40
      %s44 = sphi 0, %s43
      %s60 = sphi 0, %s44
      %s64 = sphi 0, %s64
      %s66 = sphi 0, %s64
      %s67 = sphi 0, %s66
      %s81 = sphi 0, %s67
      %s85 = sphi 0, %s85
      %s87 = sphi 0, %s85
      %s88 = sphi 0, %s87
      %s102 = sphi 0, %s88
      %s106 = sphi 0, %s106
      %s108 = sphi 0, %s106
      %s109 = sphi 0, %s108
      %s123 = sphi 0, %s109
      %s127 = sphi 0, %s127
      %s129 = sphi 0, %s127
      %s130 = sphi 0, %s129
      %s144 = sphi 0, %s130
      %s148 = sphi 0, %s148
      %s150 = sphi 0, %s148
      %s151 = sphi 0, %s150
      %s165 = sphi 0, %s151
      %s169 = sphi 0, %s169
      %s171 = sphi 0, %s169
      %s172 = sphi 0, %s171
      %s186 = sphi 0, %s172
      %s190 = sphi 0, %s190
      %s192 = sphi 0, %s190
      %s193 = sphi 0, %s192
      %s207 = sphi 0, %s193
      %s211 = sphi 0, %s211
      %s213 = sphi 0, %s211
      %s214 = sphi 0, %s213
      %s228 = sphi 0, %s214
      %s234 = sphi 0, %s236
      %s237 = sphi 0, %s234
      %s238 = sphi 0, %s237
      %s254 = sphi 0, %s238
      %s260 = sphi 0, %s262
      %s263 = sphi 0, %s260
      %s264 = sphi 0, %s263
      %s280 = sphi 0, %s264
    $region4: #{tpu_custom_call.1} parent=1 // loop_header_branch
      %33 = sbr.rel (%p31) target = $region8
    $region5: #{tpu_custom_call.1} parent=1 // loop_body
      %s35 = ssub.s32 %s30, 1
      %s36 = ssub.s32 %s30, 2
      %s37 = sadd.s32 %s30, 1
      %s38 = ssub.s32 %s30, %s37
      %p39 = scmp.eq.s32.totalorder %s38, 0
      %s41 = sadd.s32 %s40, 1
      %s42 = scalar_select %p39, %s40, %s41
      %p45 = pneg %p39
      %p46 = scmp.eq.s32.totalorder %s30, 7
      %p47 = por %p45, %p46
      %p48 = scmp.ne.s32.totalorder %s40, %s43
      %p49 = scmp.eq.s32.totalorder %s30, 0
      %p50 = por %p48, %p49
      %p51 = scmp.ne.s32.totalorder %s40, %s43
      %p52 = scmp.eq.s32.totalorder %s35, 7
      %p53 = por %p51, %p52
      %p54 = scmp.ne.s32.totalorder %s43, %s44
      %p55 = scmp.eq.s32.totalorder %s35, 0
      %p56 = por %p54, %p55
      %p57 = scmp.ne.s32.totalorder %s43, %s44
      %p58 = scmp.eq.s32.totalorder %s36, 7
      %p59 = por %p57, %p58
      %p61 = scmp.ne.s32.totalorder %s44, %s60
      %p62 = scmp.eq.s32.totalorder %s36, 0
      %p63 = por %p61, %p62
      %s65 = sadd.s32 %s64, 1
      %p68 = scmp.eq.s32.totalorder %s30, 7
      %p69 = scmp.ne.s32.totalorder %s64, %s66
      %p70 = scmp.eq.s32.totalorder %s30, 0
      %p71 = por %p69, %p70
      %p72 = scmp.ne.s32.totalorder %s64, %s66
      %p73 = scmp.eq.s32.totalorder %s35, 7
      %p74 = por %p72, %p73
      %p75 = scmp.ne.s32.totalorder %s66, %s67
      %p76 = scmp.eq.s32.totalorder %s35, 0
      %p77 = por %p75, %p76
      %p78 = scmp.ne.s32.totalorder %s66, %s67
      %p79 = scmp.eq.s32.totalorder %s36, 7
      %p80 = por %p78, %p79
      %p82 = scmp.ne.s32.totalorder %s67, %s81
      %p83 = scmp.eq.s32.totalorder %s36, 0
      %p84 = por %p82, %p83
      %s86 = sadd.s32 %s85, 1
      %p89 = scmp.eq.s32.totalorder %s30, 7
      %p90 = scmp.ne.s32.totalorder %s85, %s87
      %p91 = scmp.eq.s32.totalorder %s30, 0
      %p92 = por %p90, %p91
      %p93 = scmp.ne.s32.totalorder %s85, %s87
      %p94 = scmp.eq.s32.totalorder %s35, 7
      %p95 = por %p93, %p94
      %p96 = scmp.ne.s32.totalorder %s87, %s88
      %p97 = scmp.eq.s32.totalorder %s35, 0
      %p98 = por %p96, %p97
      %p99 = scmp.ne.s32.totalorder %s87, %s88
      %p100 = scmp.eq.s32.totalorder %s36, 7
      %p101 = por %p99, %p100
      %p103 = scmp.ne.s32.totalorder %s88, %s102
      %p104 = scmp.eq.s32.totalorder %s36, 0
      %p105 = por %p103, %p104
      %s107 = sadd.s32 %s106, 1
      %p110 = scmp.eq.s32.totalorder %s30, 7
      %p111 = scmp.ne.s32.totalorder %s106, %s108
      %p112 = scmp.eq.s32.totalorder %s30, 0
      %p113 = por %p111, %p112
      %p114 = scmp.ne.s32.totalorder %s106, %s108
      %p115 = scmp.eq.s32.totalorder %s35, 7
      %p116 = por %p114, %p115
      %p117 = scmp.ne.s32.totalorder %s108, %s109
      %p118 = scmp.eq.s32.totalorder %s35, 0
      %p119 = por %p117, %p118
      %p120 = scmp.ne.s32.totalorder %s108, %s109
      %p121 = scmp.eq.s32.totalorder %s36, 7
      %p122 = por %p120, %p121
      %p124 = scmp.ne.s32.totalorder %s109, %s123
      %p125 = scmp.eq.s32.totalorder %s36, 0
      %p126 = por %p124, %p125
      %s128 = sadd.s32 %s127, 1
      %p131 = scmp.eq.s32.totalorder %s30, 7
      %p132 = scmp.ne.s32.totalorder %s127, %s129
      %p133 = scmp.eq.s32.totalorder %s30, 0
      %p134 = por %p132, %p133
      %p135 = scmp.ne.s32.totalorder %s127, %s129
      %p136 = scmp.eq.s32.totalorder %s35, 7
      %p137 = por %p135, %p136
      %p138 = scmp.ne.s32.totalorder %s129, %s130
      %p139 = scmp.eq.s32.totalorder %s35, 0
      %p140 = por %p138, %p139
      %p141 = scmp.ne.s32.totalorder %s129, %s130
      %p142 = scmp.eq.s32.totalorder %s36, 7
      %p143 = por %p141, %p142
      %p145 = scmp.ne.s32.totalorder %s130, %s144
      %p146 = scmp.eq.s32.totalorder %s36, 0
      %p147 = por %p145, %p146
      %s149 = sadd.s32 %s148, 1
      %p152 = scmp.eq.s32.totalorder %s30, 7
      %p153 = scmp.ne.s32.totalorder %s148, %s150
      %p154 = scmp.eq.s32.totalorder %s30, 0
      %p155 = por %p153, %p154
      %p156 = scmp.ne.s32.totalorder %s148, %s150
      %p157 = scmp.eq.s32.totalorder %s35, 7
      %p158 = por %p156, %p157
      %p159 = scmp.ne.s32.totalorder %s150, %s151
      %p160 = scmp.eq.s32.totalorder %s35, 0
      %p161 = por %p159, %p160
      %p162 = scmp.ne.s32.totalorder %s150, %s151
      %p163 = scmp.eq.s32.totalorder %s36, 7
      %p164 = por %p162, %p163
      %p166 = scmp.ne.s32.totalorder %s151, %s165
      %p167 = scmp.eq.s32.totalorder %s36, 0
      %p168 = por %p166, %p167
      %s170 = sadd.s32 %s169, 1
      %p173 = scmp.eq.s32.totalorder %s30, 7
      %p174 = scmp.ne.s32.totalorder %s169, %s171
      %p175 = scmp.eq.s32.totalorder %s30, 0
      %p176 = por %p174, %p175
      %p177 = scmp.ne.s32.totalorder %s169, %s171
      %p178 = scmp.eq.s32.totalorder %s35, 7
      %p179 = por %p177, %p178
      %p180 = scmp.ne.s32.totalorder %s171, %s172
      %p181 = scmp.eq.s32.totalorder %s35, 0
      %p182 = por %p180, %p181
      %p183 = scmp.ne.s32.totalorder %s171, %s172
      %p184 = scmp.eq.s32.totalorder %s36, 7
      %p185 = por %p183, %p184
      %p187 = scmp.ne.s32.totalorder %s172, %s186
      %p188 = scmp.eq.s32.totalorder %s36, 0
      %p189 = por %p187, %p188
      %s191 = sadd.s32 %s190, 1
      %p194 = scmp.eq.s32.totalorder %s30, 7
      %p195 = scmp.ne.s32.totalorder %s190, %s192
      %p196 = scmp.eq.s32.totalorder %s30, 0
      %p197 = por %p195, %p196
      %p198 = scmp.ne.s32.totalorder %s190, %s192
      %p199 = scmp.eq.s32.totalorder %s35, 7
      %p200 = por %p198, %p199
      %p201 = scmp.ne.s32.totalorder %s192, %s193
      %p202 = scmp.eq.s32.totalorder %s35, 0
      %p203 = por %p201, %p202
      %p204 = scmp.ne.s32.totalorder %s192, %s193
      %p205 = scmp.eq.s32.totalorder %s36, 7
      %p206 = por %p204, %p205
      %p208 = scmp.ne.s32.totalorder %s193, %s207
      %p209 = scmp.eq.s32.totalorder %s36, 0
      %p210 = por %p208, %p209
      %s212 = sadd.s32 %s211, 1
      %p215 = scmp.eq.s32.totalorder %s30, 7
      %p216 = scmp.ne.s32.totalorder %s211, %s213
      %p217 = scmp.eq.s32.totalorder %s30, 0
      %p218 = por %p216, %p217
      %p219 = scmp.ne.s32.totalorder %s211, %s213
      %p220 = scmp.eq.s32.totalorder %s35, 7
      %p221 = por %p219, %p220
      %p222 = scmp.ne.s32.totalorder %s213, %s214
      %p223 = scmp.eq.s32.totalorder %s35, 0
      %p224 = por %p222, %p223
      %p225 = scmp.ne.s32.totalorder %s213, %s214
      %p226 = scmp.eq.s32.totalorder %s36, 7
      %p227 = por %p225, %p226
      %p229 = scmp.ne.s32.totalorder %s214, %s228
      %p230 = scmp.eq.s32.totalorder %s36, 0
      %p231 = por %p229, %p230
      %s232 = ssub.s32 %s30, %s37
      %p233 = scmp.eq.s32.totalorder %s232, 0
      %s235 = sadd.s32 %s234, 1
      %s236 = scalar_select %p233, %s234, %s235
      %p239 = pneg %p233
      %p240 = scmp.eq.s32.totalorder %s30, 7
      %p241 = por %p239, %p240
      %p242 = scmp.ne.s32.totalorder %s234, %s237
      %p243 = scmp.eq.s32.totalorder %s30, 0
      %p244 = por %p242, %p243
      %p245 = scmp.ne.s32.totalorder %s234, %s237
      %p246 = scmp.eq.s32.totalorder %s35, 7
      %p247 = por %p245, %p246
      %p248 = scmp.ne.s32.totalorder %s237, %s238
      %p249 = scmp.eq.s32.totalorder %s35, 0
      %p250 = por %p248, %p249
      %p251 = scmp.ne.s32.totalorder %s237, %s238
      %p252 = scmp.eq.s32.totalorder %s36, 7
      %p253 = por %p251, %p252
      %p255 = scmp.ne.s32.totalorder %s238, %s254
      %p256 = scmp.eq.s32.totalorder %s36, 0
      %p257 = por %p255, %p256
      %s258 = ssub.s32 %s30, %s37
      %p259 = scmp.eq.s32.totalorder %s258, 0
      %s261 = sadd.s32 %s260, 1
      %s262 = scalar_select %p259, %s260, %s261
      %p265 = pneg %p259
      %p266 = scmp.eq.s32.totalorder %s30, 7
      %p267 = por %p265, %p266
      %p268 = scmp.ne.s32.totalorder %s260, %s263
      %p269 = scmp.eq.s32.totalorder %s30, 0
      %p270 = por %p268, %p269
      %p271 = scmp.ne.s32.totalorder %s260, %s263
      %p272 = scmp.eq.s32.totalorder %s35, 7
      %p273 = por %p271, %p272
      %p274 = scmp.ne.s32.totalorder %s263, %s264
      %p275 = scmp.eq.s32.totalorder %s35, 0
      %p276 = por %p274, %p275
      %p277 = scmp.ne.s32.totalorder %s263, %s264
      %p278 = scmp.eq.s32.totalorder %s36, 7
      %p279 = por %p277, %p278
      %p281 = scmp.ne.s32.totalorder %s264, %s280
      %p282 = scmp.eq.s32.totalorder %s36, 0
      %p283 = por %p281, %p282
      %p284 = scmp.le.s32.totalorder 1, %s30
      %p285 = scmp.lt.s32.totalorder %s30, 9
      %p286 = pnand %p284, %p285
      %p287 = pneg %p286
      // Predicated region
      $region9: #{tpu_custom_call.1} parent=5 // pred_check
        _
      $region10: #{tpu_custom_call.1} parent=5 // pred_check_branch
        %289 = sbr.rel (%p286) target = $region12
      $region11: #{tpu_custom_call.1} parent=5 // pred_region
        %s290 = ssub.s32 %s30, 1
        // Predicated region
        $region13: #{tpu_custom_call.1} parent=11 // pred_check
          %p291 = pneg %p77
        $region14: #{tpu_custom_call.1} parent=11 // pred_check_branch
          %293 = sbr.rel (%p291) target = $region16
        $region15: #{tpu_custom_call.1} parent=11 // pred_region
          %s295 = ssub.s32 128, 128
          %296 = vsyncadd [#allocation8], %s295
          %s298 = sshll.u32 [#allocation7], 4
          %s299 = int_to_ptr.vmem [resolvable:$true] %s298
          %301 = dma.hbm_to_vmem [thread:$0]  %s1, 128, %s299, [#allocation8]
        $region16: #{tpu_custom_call.1} parent=11 // pred_fallthru
          _
        // Predicated region
        $region17: #{tpu_custom_call.1} parent=11 // pred_check
          %p302 = pneg %p98
        $region18: #{tpu_custom_call.1} parent=11 // pred_check_branch
          %304 = sbr.rel (%p302) target = $region20
        $region19: #{tpu_custom_call.1} parent=11 // pred_region
          %s306 = ssub.s32 128, 128
          %307 = vsyncadd [#allocation8], %s306
          %s309 = sshll.u32 [#allocation9], 4
          %s310 = int_to_ptr.vmem [resolvable:$true] %s309
          %312 = dma.hbm_to_vmem [thread:$0]  %s2, 128, %s310, [#allocation8]
        $region20: #{tpu_custom_call.1} parent=11 // pred_fallthru
          _
        // Predicated region
        $region21: #{tpu_custom_call.1} parent=11 // pred_check
          %p313 = pneg %p119
        $region22: #{tpu_custom_call.1} parent=11 // pred_check_branch
          %315 = sbr.rel (%p313) target = $region24
        $region23: #{tpu_custom_call.1} parent=11 // pred_region
          %s317 = ssub.s32 256, 256
          %318 = vsyncadd [#allocation11], %s317
          %s319 = sshll.u32 [#allocation10], 4
          %s320 = int_to_ptr.vmem [resolvable:$true] %s319
          %325 = dma.hbm_to_vmem [thread:$0]  %s3, 256, %s320, [#allocation11], 128, 128, 8
        $region24: #{tpu_custom_call.1} parent=11 // pred_fallthru
          _
        // Predicated region
        $region25: #{tpu_custom_call.1} parent=11 // pred_check
          %p326 = pneg %p140
        $region26: #{tpu_custom_call.1} parent=11 // pred_check_branch
          %328 = sbr.rel (%p326) target = $region28
        $region27: #{tpu_custom_call.1} parent=11 // pred_region
          %s330 = ssub.s32 2048, 2048
          %331 = vsyncadd [#allocation11], %s330
          %s332 = sshll.u32 [#allocation12], 4
          %s333 = int_to_ptr.vmem [resolvable:$true] %s332
          %338 = dma.hbm_to_vmem [thread:$0]  %s4, 2048, %s333, [#allocation11], 128, 128, 8
        $region28: #{tpu_custom_call.1} parent=11 // pred_fallthru
          _
        // Predicated region
        $region29: #{tpu_custom_call.1} parent=11 // pred_check
          %p339 = pneg %p161
        $region30: #{tpu_custom_call.1} parent=11 // pred_check_branch
          %341 = sbr.rel (%p339) target = $region32
        $region31: #{tpu_custom_call.1} parent=11 // pred_region
          %s343 = ssub.s32 2048, 2048
          %344 = vsyncadd [#allocation14], %s343
          %s345 = sshll.u32 [#allocation13], 4
          %s346 = int_to_ptr.vmem [resolvable:$true] %s345
          %351 = dma.hbm_to_vmem [thread:$0]  %s5, 2048, %s346, [#allocation14], 128, 128, 8
        $region32: #{tpu_custom_call.1} parent=11 // pred_fallthru
          _
        // Predicated region
        $region33: #{tpu_custom_call.1} parent=11 // pred_check
          %p352 = pneg %p182
        $region34: #{tpu_custom_call.1} parent=11 // pred_check_branch
          %354 = sbr.rel (%p352) target = $region36
        $region35: #{tpu_custom_call.1} parent=11 // pred_region
          %s356 = ssub.s32 256, 256
          %357 = vsyncadd [#allocation14], %s356
          %s358 = sshll.u32 [#allocation15], 4
          %s359 = int_to_ptr.vmem [resolvable:$true] %s358
          %364 = dma.hbm_to_vmem [thread:$0]  %s6, 256, %s359, [#allocation14], 128, 128, 8
        $region36: #{tpu_custom_call.1} parent=11 // pred_fallthru
          _
        // Predicated region
        $region37: #{tpu_custom_call.1} parent=11 // pred_check
          %p365 = pneg %p203
        $region38: #{tpu_custom_call.1} parent=11 // pred_check_branch
          %367 = sbr.rel (%p365) target = $region40
        $region39: #{tpu_custom_call.1} parent=11 // pred_region
          %s369 = ssub.s32 2048, 2048
          %370 = vsyncadd [#allocation17], %s369
          %s371 = sshll.u32 [#allocation16], 4
          %s372 = int_to_ptr.vmem [resolvable:$true] %s371
          %377 = dma.hbm_to_vmem [thread:$0]  %s7, 2048, %s372, [#allocation17], 128, 128, 8
        $region40: #{tpu_custom_call.1} parent=11 // pred_fallthru
          _
        // Predicated region
        $region41: #{tpu_custom_call.1} parent=11 // pred_check
          %p378 = pneg %p224
        $region42: #{tpu_custom_call.1} parent=11 // pred_check_branch
          %380 = sbr.rel (%p378) target = $region44
        $region43: #{tpu_custom_call.1} parent=11 // pred_region
          %s382 = ssub.s32 2048, 2048
          %383 = vsyncadd [#allocation17], %s382
          %s384 = sshll.u32 [#allocation18], 4
          %s385 = int_to_ptr.vmem [resolvable:$true] %s384
          %390 = dma.hbm_to_vmem [thread:$0]  %s8, 2048, %s385, [#allocation17], 128, 128, 8
        $region44: #{tpu_custom_call.1} parent=11 // pred_fallthru
          _
      $region12: #{tpu_custom_call.1} parent=5 // pred_fallthru
        _
      %p391 = scmp.lt.s32.totalorder %s30, 8
      // Predicated region
      $region45: #{tpu_custom_call.1} parent=5 // pred_check
        %p392 = pneg %p391
      $region46: #{tpu_custom_call.1} parent=5 // pred_check_branch
        %394 = sbr.rel (%p392) target = $region48
      $region47: #{tpu_custom_call.1} parent=5 // pred_region
        // Predicated region
        $region49: #{tpu_custom_call.1} parent=47 // pred_check
          %p395 = pneg %p50
        $region50: #{tpu_custom_call.1} parent=47 // pred_check_branch
          %397 = sbr.rel (%p395) target = $region52
        $region51: #{tpu_custom_call.1} parent=47 // pred_region
          %s398 = sand.u32 %s40, 1
          %s399 = scalar_lea.sflag [#allocation5], %s398
          %s400 = sand.u32 %s40, 1
          %s401 = smul.addr %s400, 8
          %s402 = scalar_lea.vmem [#allocation4], %s401
          %s404 = ssub.s32 128, 128
          %405 = vsyncadd %s399, %s404
          %s406 = smul.addr %s30, 128
          %s407 = scalar_lea.hbm %s0, %s406
          %s409 = sshll.u32 %s402, 4
          %s410 = int_to_ptr.vmem [resolvable:$true] %s409
          %412 = dma.hbm_to_vmem [thread:$0]  %s407, 128, %s410, %s399
        $region52: #{tpu_custom_call.1} parent=47 // pred_fallthru
          _
      $region48: #{tpu_custom_call.1} parent=5 // pred_fallthru
        _
      %p413 = scmp.le.s32.totalorder 1, %s30
      %p414 = scmp.lt.s32.totalorder %s30, 9
      %p415 = pnand %p413, %p414
      %p416 = pneg %p415
      // Predicated region
      $region53: #{tpu_custom_call.1} parent=5 // pred_check
        _
      $region54: #{tpu_custom_call.1} parent=5 // pred_check_branch
        %418 = sbr.rel (%p415) target = $region56
      $region55: #{tpu_custom_call.1} parent=5 // pred_region
        %s419 = ssub.s32 %s30, 1
        %s420 = sand.u32 %s43, 1
        %s421 = scalar_lea.sflag [#allocation5], %s420
        %s422 = sand.u32 %s43, 1
        %s423 = smul.addr %s422, 8
        %s424 = scalar_lea.vmem [#allocation4], %s423
        // Predicated region
        $region57: #{tpu_custom_call.1} parent=55 // pred_check
          %p425 = pneg %p56
        $region58: #{tpu_custom_call.1} parent=55 // pred_check_branch
          %427 = sbr.rel (%p425) target = $region60
        $region59: #{tpu_custom_call.1} parent=55 // pred_region
          %428 = dma.done %s421, 128
        $region60: #{tpu_custom_call.1} parent=55 // pred_fallthru
          _
        // Predicated region
        $region61: #{tpu_custom_call.1} parent=55 // pred_check
          %p429 = pneg %p77
        $region62: #{tpu_custom_call.1} parent=55 // pred_check_branch
          %431 = sbr.rel (%p429) target = $region64
        $region63: #{tpu_custom_call.1} parent=55 // pred_region
          %432 = dma.done [#allocation8], 128
        $region64: #{tpu_custom_call.1} parent=55 // pred_fallthru
          _
        // Predicated region
        $region65: #{tpu_custom_call.1} parent=55 // pred_check
          %p433 = pneg %p98
        $region66: #{tpu_custom_call.1} parent=55 // pred_check_branch
          %435 = sbr.rel (%p433) target = $region68
        $region67: #{tpu_custom_call.1} parent=55 // pred_region
          %436 = dma.done [#allocation8], 128
        $region68: #{tpu_custom_call.1} parent=55 // pred_fallthru
          _
        // Predicated region
        $region69: #{tpu_custom_call.1} parent=55 // pred_check
          %p437 = pneg %p119
        $region70: #{tpu_custom_call.1} parent=55 // pred_check_branch
          %439 = sbr.rel (%p437) target = $region72
        $region71: #{tpu_custom_call.1} parent=55 // pred_region
          %440 = dma.done [#allocation11], 256
        $region72: #{tpu_custom_call.1} parent=55 // pred_fallthru
          _
        // Predicated region
        $region73: #{tpu_custom_call.1} parent=55 // pred_check
          %p441 = pneg %p140
        $region74: #{tpu_custom_call.1} parent=55 // pred_check_branch
          %443 = sbr.rel (%p441) target = $region76
        $region75: #{tpu_custom_call.1} parent=55 // pred_region
          %444 = dma.done [#allocation11], 2048
        $region76: #{tpu_custom_call.1} parent=55 // pred_fallthru
          _
        // Predicated region
        $region77: #{tpu_custom_call.1} parent=55 // pred_check
          %p445 = pneg %p161
        $region78: #{tpu_custom_call.1} parent=55 // pred_check_branch
          %447 = sbr.rel (%p445) target = $region80
        $region79: #{tpu_custom_call.1} parent=55 // pred_region
          %448 = dma.done [#allocation14], 2048
        $region80: #{tpu_custom_call.1} parent=55 // pred_fallthru
          _
        // Predicated region
        $region81: #{tpu_custom_call.1} parent=55 // pred_check
          %p449 = pneg %p182
        $region82: #{tpu_custom_call.1} parent=55 // pred_check_branch
          %451 = sbr.rel (%p449) target = $region84
        $region83: #{tpu_custom_call.1} parent=55 // pred_region
          %452 = dma.done [#allocation14], 256
        $region84: #{tpu_custom_call.1} parent=55 // pred_fallthru
          _
        // Predicated region
        $region85: #{tpu_custom_call.1} parent=55 // pred_check
          %p453 = pneg %p203
        $region86: #{tpu_custom_call.1} parent=55 // pred_check_branch
          %455 = sbr.rel (%p453) target = $region88
        $region87: #{tpu_custom_call.1} parent=55 // pred_region
          %456 = dma.done [#allocation17], 2048
        $region88: #{tpu_custom_call.1} parent=55 // pred_fallthru
          _
        // Predicated region
        $region89: #{tpu_custom_call.1} parent=55 // pred_check
          %p457 = pneg %p224
        $region90: #{tpu_custom_call.1} parent=55 // pred_check_branch
          %459 = sbr.rel (%p457) target = $region92
        $region91: #{tpu_custom_call.1} parent=55 // pred_region
          %460 = dma.done [#allocation17], 2048
        $region92: #{tpu_custom_call.1} parent=55 // pred_fallthru
          _
        %s461 = sand.u32 %s43, 1
        %s462 = scalar_lea.sflag [#allocation5], %s461
        %s463 = sand.u32 %s43, 1
        %s464 = smul.addr %s463, 8
        %s465 = scalar_lea.vmem [#allocation4], %s464
        %p466 = pneg %p56
        %p467 = pneg %p53
        %p468 = pneg %p77
        %p469 = pneg %p74
        %p470 = pneg %p98
        %p471 = pneg %p95
        %p472 = pneg %p119
        %p473 = pneg %p116
        %p474 = pneg %p140
        %p475 = pneg %p137
        %p476 = pneg %p161
        %p477 = pneg %p158
        %p478 = pneg %p182
        %p479 = pneg %p179
        %p480 = pneg %p203
        %p481 = pneg %p200
        %p482 = pneg %p224
        %p483 = pneg %p221
        %p484 = pneg %p250
        %p485 = pneg %p247
        %s486 = sand.u32 %s237, 1
        %s487 = scalar_lea.sflag [#allocation6], %s486
        %s488 = sand.u32 %s237, 1
        %s489 = smul.addr %s488, 8
        %s490 = scalar_lea.vmem [#allocation19], %s489
        %p491 = pneg %p276
        %p492 = pneg %p273
        %s493 = sand.u32 %s263, 1
        %s494 = scalar_lea.sflag [#allocation21], %s493
        %s495 = sand.u32 %s263, 1
        %s496 = smul.addr %s495, 8
        %s497 = scalar_lea.vmem [#allocation20], %s496
        %p498 = scmp.eq.s32.totalorder %s35, 0
        // Predicated region
        $region93: #{tpu_custom_call.1} parent=55 // pred_check
          %p499 = pneg %p498
        $region94: #{tpu_custom_call.1} parent=55 // pred_check_branch
          %501 = sbr.rel (%p499) target = $region96
        $region95: #{tpu_custom_call.1} parent=55 // pred_region
          %v502 = vld [vmem:[#allocation7] sm:$0xff]
          %503 = vst [vmem:[#allocation2] sm:$0xff] %v502
          %v504 = vld [vmem:[#allocation9] sm:$0xff]
          %505 = vst [vmem:[#allocation3] sm:$0xff] %v504
        $region96: #{tpu_custom_call.1} parent=55 // pred_fallthru
          _
        %v506 = vld [vmem:[%s424] sm:$0xff]
        %v507 = vld [vmem:[#allocation2] sm:$0xff]
        %v508 = vld [vmem:[#allocation3] sm:$0xff]
        %v509 = vld [vmem:[#allocation10] sm:$0xff]
        %v510 = vld [vmem:[#allocation10 + $0x8] sm:$0xff]
        %v511 = vld [vmem:[#allocation12] sm:$0xff]
        %v512 = vld [vmem:[#allocation12 + $0x8] sm:$0xff]
        %v513 = vld [vmem:[#allocation12 + $0x10] sm:$0xff]
        %v514 = vld [vmem:[#allocation12 + $0x18] sm:$0xff]
        %v515 = vld [vmem:[#allocation12 + $0x20] sm:$0xff]
        %v516 = vld [vmem:[#allocation12 + $0x28] sm:$0xff]
        %v517 = vld [vmem:[#allocation12 + $0x30] sm:$0xff]
        %v518 = vld [vmem:[#allocation12 + $0x38] sm:$0xff]
        %v519 = vld [vmem:[#allocation12 + $0x40] sm:$0xff]
        %v520 = vld [vmem:[#allocation12 + $0x48] sm:$0xff]
        %v521 = vld [vmem:[#allocation12 + $0x50] sm:$0xff]
        %v522 = vld [vmem:[#allocation12 + $0x58] sm:$0xff]
        %v523 = vld [vmem:[#allocation12 + $0x60] sm:$0xff]
        %v524 = vld [vmem:[#allocation12 + $0x68] sm:$0xff]
        %v525 = vld [vmem:[#allocation12 + $0x70] sm:$0xff]
        %v526 = vld [vmem:[#allocation12 + $0x78] sm:$0xff]
        %527 = vmatprep.subr.mxu0 0.0
        %528 = vmatpush1.msra.mxu0 %v526
        %529 = vmatprep.subr.mxu0 0.0
        %530 = vmatpush1.msra.mxu0 %v525
        %531 = vmatprep.subr.mxu0 0.0
        %532 = vmatpush1.msra.mxu0 %v524
        %533 = vmatprep.subr.mxu0 0.0
        %534 = vmatpush1.msra.mxu0 %v523
        %535 = vmatprep.subr.mxu0 0.0
        %536 = vmatpush1.msra.mxu0 %v522
        %537 = vmatprep.subr.mxu0 0.0
        %538 = vmatpush1.msra.mxu0 %v521
        %539 = vmatprep.subr.mxu0 0.0
        %540 = vmatpush1.msra.mxu0 %v520
        %541 = vmatprep.subr.mxu0 0.0
        %542 = vmatpush1.msra.mxu0 %v519
        %543 = vmatprep.subr.mxu0 0.0
        %544 = vmatpush1.msra.mxu0 %v518
        %545 = vmatprep.subr.mxu0 0.0
        %546 = vmatpush1.msra.mxu0 %v517
        %547 = vmatprep.subr.mxu0 0.0
        %548 = vmatpush1.msra.mxu0 %v516
        %549 = vmatprep.subr.mxu0 0.0
        %550 = vmatpush1.msra.mxu0 %v515
        %551 = vmatprep.subr.mxu0 0.0
        %552 = vmatpush1.msra.mxu0 %v514
        %553 = vmatprep.subr.mxu0 0.0
        %554 = vmatpush1.msra.mxu0 %v513
        %555 = vmatprep.subr.mxu0 0.0
        %556 = vmatpush1.msra.mxu0 %v512
        %557 = vmatprep.subr.mxu0 0.0
        %558 = vmatpush1.msra.mxu0 %v511
        %559 = vmatprep.subr.mxu0 0.0
        %560 = vmatpush2.msra.mxu0 0.0
        %561 = vmatprep.subr.mxu0 0.0
        %562 = vmatpush2.msra.mxu0 0.0
        %563 = vmatprep.subr.mxu0 0.0
        %564 = vmatpush2.msra.mxu0 0.0
        %565 = vmatprep.subr.mxu0 0.0
        %566 = vmatpush2.msra.mxu0 0.0
        %567 = vmatprep.subr.mxu0 0.0
        %568 = vmatpush2.msra.mxu0 0.0
        %569 = vmatprep.subr.mxu0 0.0
        %570 = vmatpush2.msra.mxu0 0.0
        %571 = vmatprep.subr.mxu0 0.0
        %572 = vmatpush2.msra.mxu0 0.0
        %573 = vmatprep.subr.mxu0 0.0
        %574 = vmatpush2.msra.mxu0 0.0
        %575 = vmatprep.subr.mxu0 0.0
        %576 = vmatpush2.msra.mxu0 0.0
        %577 = vmatprep.subr.mxu0 0.0
        %578 = vmatpush2.msra.mxu0 0.0
        %579 = vmatprep.subr.mxu0 0.0
        %580 = vmatpush2.msra.mxu0 0.0
        %581 = vmatprep.subr.mxu0 0.0
        %582 = vmatpush2.msra.mxu0 0.0
        %583 = vmatprep.subr.mxu0 0.0
        %584 = vmatpush2.msra.mxu0 0.0
        %585 = vmatprep.subr.mxu0 0.0
        %586 = vmatpush2.msra.mxu0 0.0
        %587 = vmatprep.subr.mxu0 0.0
        %588 = vmatpush2.msra.mxu0 0.0
        %589 = vmatprep.subr.mxu0 0.0
        %590 = vmatpush2.msra.mxu0 0.0
        %591 = vmatprep.mubr.f32.mxu0 0.0
        %592 = vmatmul.mubr.f32.gmra.mxu0 %v507
        %v593 = vpop.f32.mrf.mxu0
        %v594 = vadd.f32 0.0, %v593
        %v595 = vpop.f32.mrf.mxu0
        %596 = vdwg.mxu0
        %vm597 = vcmask 130048
        %v599 = vsel %vm597, %v506, 0
        %601 = vmatprep.subr.mxu0 0.0
        %602 = vmatpush1.msra.mxu0 0.0
        %603 = vmatprep.subr.mxu0 0.0
        %604 = vmatpush1.msra.mxu0 0.0
        %605 = vmatprep.subr.mxu0 0.0
        %606 = vmatpush1.msra.mxu0 0.0
        %607 = vmatprep.subr.mxu0 0.0
        %608 = vmatpush1.msra.mxu0 0.0
        %609 = vmatprep.subr.mxu0 0.0
        %610 = vmatpush1.msra.mxu0 0.0
        %611 = vmatprep.subr.mxu0 0.0
        %612 = vmatpush1.msra.mxu0 0.0
        %613 = vmatprep.subr.mxu0 0.0
        %614 = vmatpush1.msra.mxu0 0.0
        %615 = vmatprep.subr.mxu0 0.0
        %616 = vmatpush1.msra.mxu0 0.0
        %617 = vmatprep.subr.mxu0 0.0
        %618 = vmatpush1.msra.mxu0 0.0
        %619 = vmatprep.subr.mxu0 0.0
        %620 = vmatpush1.msra.mxu0 0.0
        %621 = vmatprep.subr.mxu0 0.0
        %622 = vmatpush1.msra.mxu0 0.0
        %623 = vmatprep.subr.mxu0 0.0
        %624 = vmatpush1.msra.mxu0 0.0
        %625 = vmatprep.subr.mxu0 0.0
        %626 = vmatpush1.msra.mxu0 0.0
        %627 = vmatprep.subr.mxu0 0.0
        %628 = vmatpush1.msra.mxu0 0.0
        %629 = vmatprep.subr.mxu0 0.0
        %630 = vmatpush1.msra.mxu0 %v510
        %631 = vmatprep.subr.mxu0 0.0
        %632 = vmatpush1.msra.mxu0 %v509
        %633 = vmatprep.subr.mxu0 0.0
        %634 = vmatpush2.msra.mxu0 0.0
        %635 = vmatprep.subr.mxu0 0.0
        %636 = vmatpush2.msra.mxu0 0.0
        %637 = vmatprep.subr.mxu0 0.0
        %638 = vmatpush2.msra.mxu0 0.0
        %639 = vmatprep.subr.mxu0 0.0
        %640 = vmatpush2.msra.mxu0 0.0
        %641 = vmatprep.subr.mxu0 0.0
        %642 = vmatpush2.msra.mxu0 0.0
        %643 = vmatprep.subr.mxu0 0.0
        %644 = vmatpush2.msra.mxu0 0.0
        %645 = vmatprep.subr.mxu0 0.0
        %646 = vmatpush2.msra.mxu0 0.0
        %647 = vmatprep.subr.mxu0 0.0
        %648 = vmatpush2.msra.mxu0 0.0
        %649 = vmatprep.subr.mxu0 0.0
        %650 = vmatpush2.msra.mxu0 0.0
        %651 = vmatprep.subr.mxu0 0.0
        %652 = vmatpush2.msra.mxu0 0.0
        %653 = vmatprep.subr.mxu0 0.0
        %654 = vmatpush2.msra.mxu0 0.0
        %655 = vmatprep.subr.mxu0 0.0
        %656 = vmatpush2.msra.mxu0 0.0
        %657 = vmatprep.subr.mxu0 0.0
        %658 = vmatpush2.msra.mxu0 0.0
        %659 = vmatprep.subr.mxu0 0.0
        %660 = vmatpush2.msra.mxu0 0.0
        %661 = vmatprep.subr.mxu0 0.0
        %662 = vmatpush2.msra.mxu0 0.0
        %663 = vmatprep.subr.mxu0 0.0
        %664 = vmatpush2.msra.mxu0 0.0
        %665 = vmatprep.mubr.f32.mxu0 0.0
        %666 = vmatmul.mubr.f32.gmra.mxu0 %v599
        %v667 = vpop.f32.mrf.mxu0
        %v668 = vadd.f32 %v594, %v667
        %v669 = vpop.f32.mrf.mxu0
        %670 = vdwg.mxu0
        %v671 = vld [vmem:[#allocation13] sm:$0xff]
        %v672 = vld [vmem:[#allocation13 + $0x8] sm:$0xff]
        %v673 = vld [vmem:[#allocation13 + $0x10] sm:$0xff]
        %v674 = vld [vmem:[#allocation13 + $0x18] sm:$0xff]
        %v675 = vld [vmem:[#allocation13 + $0x20] sm:$0xff]
        %v676 = vld [vmem:[#allocation13 + $0x28] sm:$0xff]
        %v677 = vld [vmem:[#allocation13 + $0x30] sm:$0xff]
        %v678 = vld [vmem:[#allocation13 + $0x38] sm:$0xff]
        %v679 = vld [vmem:[#allocation13 + $0x40] sm:$0xff]
        %v680 = vld [vmem:[#allocation13 + $0x48] sm:$0xff]
        %v681 = vld [vmem:[#allocation13 + $0x50] sm:$0xff]
        %v682 = vld [vmem:[#allocation13 + $0x58] sm:$0xff]
        %v683 = vld [vmem:[#allocation13 + $0x60] sm:$0xff]
        %v684 = vld [vmem:[#allocation13 + $0x68] sm:$0xff]
        %v685 = vld [vmem:[#allocation13 + $0x70] sm:$0xff]
        %v686 = vld [vmem:[#allocation13 + $0x78] sm:$0xff]
        %687 = vmatprep.subr.mxu0 0.0
        %688 = vmatpush1.msra.mxu0 %v686
        %689 = vmatprep.subr.mxu0 0.0
        %690 = vmatpush1.msra.mxu0 %v685
        %691 = vmatprep.subr.mxu0 0.0
        %692 = vmatpush1.msra.mxu0 %v684
        %693 = vmatprep.subr.mxu0 0.0
        %694 = vmatpush1.msra.mxu0 %v683
        %695 = vmatprep.subr.mxu0 0.0
        %696 = vmatpush1.msra.mxu0 %v682
        %697 = vmatprep.subr.mxu0 0.0
        %698 = vmatpush1.msra.mxu0 %v681
        %699 = vmatprep.subr.mxu0 0.0
        %700 = vmatpush1.msra.mxu0 %v680
        %701 = vmatprep.subr.mxu0 0.0
        %702 = vmatpush1.msra.mxu0 %v679
        %703 = vmatprep.subr.mxu0 0.0
        %704 = vmatpush1.msra.mxu0 %v678
        %705 = vmatprep.subr.mxu0 0.0
        %706 = vmatpush1.msra.mxu0 %v677
        %707 = vmatprep.subr.mxu0 0.0
        %708 = vmatpush1.msra.mxu0 %v676
        %709 = vmatprep.subr.mxu0 0.0
        %710 = vmatpush1.msra.mxu0 %v675
        %711 = vmatprep.subr.mxu0 0.0
        %712 = vmatpush1.msra.mxu0 %v674
        %713 = vmatprep.subr.mxu0 0.0
        %714 = vmatpush1.msra.mxu0 %v673
        %715 = vmatprep.subr.mxu0 0.0
        %716 = vmatpush1.msra.mxu0 %v672
        %717 = vmatprep.subr.mxu0 0.0
        %718 = vmatpush1.msra.mxu0 %v671
        %719 = vmatprep.subr.mxu0 0.0
        %720 = vmatpush2.msra.mxu0 0.0
        %721 = vmatprep.subr.mxu0 0.0
        %722 = vmatpush2.msra.mxu0 0.0
        %723 = vmatprep.subr.mxu0 0.0
        %724 = vmatpush2.msra.mxu0 0.0
        %725 = vmatprep.subr.mxu0 0.0
        %726 = vmatpush2.msra.mxu0 0.0
        %727 = vmatprep.subr.mxu0 0.0
        %728 = vmatpush2.msra.mxu0 0.0
        %729 = vmatprep.subr.mxu0 0.0
        %730 = vmatpush2.msra.mxu0 0.0
        %731 = vmatprep.subr.mxu0 0.0
        %732 = vmatpush2.msra.mxu0 0.0
        %733 = vmatprep.subr.mxu0 0.0
        %734 = vmatpush2.msra.mxu0 0.0
        %735 = vmatprep.subr.mxu0 0.0
        %736 = vmatpush2.msra.mxu0 0.0
        %737 = vmatprep.subr.mxu0 0.0
        %738 = vmatpush2.msra.mxu0 0.0
        %739 = vmatprep.subr.mxu0 0.0
        %740 = vmatpush2.msra.mxu0 0.0
        %741 = vmatprep.subr.mxu0 0.0
        %742 = vmatpush2.msra.mxu0 0.0
        %743 = vmatprep.subr.mxu0 0.0
        %744 = vmatpush2.msra.mxu0 0.0
        %745 = vmatprep.subr.mxu0 0.0
        %746 = vmatpush2.msra.mxu0 0.0
        %747 = vmatprep.subr.mxu0 0.0
        %748 = vmatpush2.msra.mxu0 0.0
        %749 = vmatprep.subr.mxu0 0.0
        %750 = vmatpush2.msra.mxu0 0.0
        %751 = vmatprep.mubr.f32.mxu0 0.0
        %752 = vmatmul.mubr.f32.gmra.mxu0 %v508
        %v753 = vpop.f32.mrf.mxu0
        %v754 = vadd.f32 0.0, %v753
        %v755 = vpop.f32.mrf.mxu0
        %756 = vdwg.mxu0
        %v757 = vadd.f32 %v668, %v754
        %v758 = vld [vmem:[#allocation15] sm:$0xff]
        %v759 = vld [vmem:[#allocation15 + $0x8] sm:$0xff]
        %v760 = vld [vmem:[#allocation16] sm:$0xff]
        %v761 = vld [vmem:[#allocation16 + $0x8] sm:$0xff]
        %v762 = vld [vmem:[#allocation16 + $0x10] sm:$0xff]
        %v763 = vld [vmem:[#allocation16 + $0x18] sm:$0xff]
        %v764 = vld [vmem:[#allocation16 + $0x20] sm:$0xff]
        %v765 = vld [vmem:[#allocation16 + $0x28] sm:$0xff]
        %v766 = vld [vmem:[#allocation16 + $0x30] sm:$0xff]
        %v767 = vld [vmem:[#allocation16 + $0x38] sm:$0xff]
        %v768 = vld [vmem:[#allocation16 + $0x40] sm:$0xff]
        %v769 = vld [vmem:[#allocation16 + $0x48] sm:$0xff]
        %v770 = vld [vmem:[#allocation16 + $0x50] sm:$0xff]
        %v771 = vld [vmem:[#allocation16 + $0x58] sm:$0xff]
        %v772 = vld [vmem:[#allocation16 + $0x60] sm:$0xff]
        %v773 = vld [vmem:[#allocation16 + $0x68] sm:$0xff]
        %v774 = vld [vmem:[#allocation16 + $0x70] sm:$0xff]
        %v775 = vld [vmem:[#allocation16 + $0x78] sm:$0xff]
        %776 = vmatprep.subr.mxu0 0.0
        %777 = vmatpush1.msra.mxu0 %v775
        %778 = vmatprep.subr.mxu0 0.0
        %779 = vmatpush1.msra.mxu0 %v774
        %780 = vmatprep.subr.mxu0 0.0
        %781 = vmatpush1.msra.mxu0 %v773
        %782 = vmatprep.subr.mxu0 0.0
        %783 = vmatpush1.msra.mxu0 %v772
        %784 = vmatprep.subr.mxu0 0.0
        %785 = vmatpush1.msra.mxu0 %v771
        %786 = vmatprep.subr.mxu0 0.0
        %787 = vmatpush1.msra.mxu0 %v770
        %788 = vmatprep.subr.mxu0 0.0
        %789 = vmatpush1.msra.mxu0 %v769
        %790 = vmatprep.subr.mxu0 0.0
        %791 = vmatpush1.msra.mxu0 %v768
        %792 = vmatprep.subr.mxu0 0.0
        %793 = vmatpush1.msra.mxu0 %v767
        %794 = vmatprep.subr.mxu0 0.0
        %795 = vmatpush1.msra.mxu0 %v766
        %796 = vmatprep.subr.mxu0 0.0
        %797 = vmatpush1.msra.mxu0 %v765
        %798 = vmatprep.subr.mxu0 0.0
        %799 = vmatpush1.msra.mxu0 %v764
        %800 = vmatprep.subr.mxu0 0.0
        %801 = vmatpush1.msra.mxu0 %v763
        %802 = vmatprep.subr.mxu0 0.0
        %803 = vmatpush1.msra.mxu0 %v762
        %804 = vmatprep.subr.mxu0 0.0
        %805 = vmatpush1.msra.mxu0 %v761
        %806 = vmatprep.subr.mxu0 0.0
        %807 = vmatpush1.msra.mxu0 %v760
        %808 = vmatprep.subr.mxu0 0.0
        %809 = vmatpush2.msra.mxu0 0.0
        %810 = vmatprep.subr.mxu0 0.0
        %811 = vmatpush2.msra.mxu0 0.0
        %812 = vmatprep.subr.mxu0 0.0
        %813 = vmatpush2.msra.mxu0 0.0
        %814 = vmatprep.subr.mxu0 0.0
        %815 = vmatpush2.msra.mxu0 0.0
        %816 = vmatprep.subr.mxu0 0.0
        %817 = vmatpush2.msra.mxu0 0.0
        %818 = vmatprep.subr.mxu0 0.0
        %819 = vmatpush2.msra.mxu0 0.0
        %820 = vmatprep.subr.mxu0 0.0
        %821 = vmatpush2.msra.mxu0 0.0
        %822 = vmatprep.subr.mxu0 0.0
        %823 = vmatpush2.msra.mxu0 0.0
        %824 = vmatprep.subr.mxu0 0.0
        %825 = vmatpush2.msra.mxu0 0.0
        %826 = vmatprep.subr.mxu0 0.0
        %827 = vmatpush2.msra.mxu0 0.0
        %828 = vmatprep.subr.mxu0 0.0
        %829 = vmatpush2.msra.mxu0 0.0
        %830 = vmatprep.subr.mxu0 0.0
        %831 = vmatpush2.msra.mxu0 0.0
        %832 = vmatprep.subr.mxu0 0.0
        %833 = vmatpush2.msra.mxu0 0.0
        %834 = vmatprep.subr.mxu0 0.0
        %835 = vmatpush2.msra.mxu0 0.0
        %836 = vmatprep.subr.mxu0 0.0
        %837 = vmatpush2.msra.mxu0 0.0
        %838 = vmatprep.subr.mxu0 0.0
        %839 = vmatpush2.msra.mxu0 0.0
        %840 = vmatprep.mubr.f32.mxu0 0.0
        %841 = vmatmul.mubr.f32.gmra.mxu0 %v507
        %v842 = vpop.f32.mrf.mxu0
        %v843 = vadd.f32 0.0, %v842
        %v844 = vpop.f32.mrf.mxu0
        %845 = vdwg.mxu0
        %846 = vmatprep.subr.mxu0 0.0
        %847 = vmatpush1.msra.mxu0 0.0
        %848 = vmatprep.subr.mxu0 0.0
        %849 = vmatpush1.msra.mxu0 0.0
        %850 = vmatprep.subr.mxu0 0.0
        %851 = vmatpush1.msra.mxu0 0.0
        %852 = vmatprep.subr.mxu0 0.0
        %853 = vmatpush1.msra.mxu0 0.0
        %854 = vmatprep.subr.mxu0 0.0
        %855 = vmatpush1.msra.mxu0 0.0
        %856 = vmatprep.subr.mxu0 0.0
        %857 = vmatpush1.msra.mxu0 0.0
        %858 = vmatprep.subr.mxu0 0.0
        %859 = vmatpush1.msra.mxu0 0.0
        %860 = vmatprep.subr.mxu0 0.0
        %861 = vmatpush1.msra.mxu0 0.0
        %862 = vmatprep.subr.mxu0 0.0
        %863 = vmatpush1.msra.mxu0 0.0
        %864 = vmatprep.subr.mxu0 0.0
        %865 = vmatpush1.msra.mxu0 0.0
        %866 = vmatprep.subr.mxu0 0.0
        %867 = vmatpush1.msra.mxu0 0.0
        %868 = vmatprep.subr.mxu0 0.0
        %869 = vmatpush1.msra.mxu0 0.0
        %870 = vmatprep.subr.mxu0 0.0
        %871 = vmatpush1.msra.mxu0 0.0
        %872 = vmatprep.subr.mxu0 0.0
        %873 = vmatpush1.msra.mxu0 0.0
        %874 = vmatprep.subr.mxu0 0.0
        %875 = vmatpush1.msra.mxu0 %v759
        %876 = vmatprep.subr.mxu0 0.0
        %877 = vmatpush1.msra.mxu0 %v758
        %878 = vmatprep.subr.mxu0 0.0
        %879 = vmatpush2.msra.mxu0 0.0
        %880 = vmatprep.subr.mxu0 0.0
        %881 = vmatpush2.msra.mxu0 0.0
        %882 = vmatprep.subr.mxu0 0.0
        %883 = vmatpush2.msra.mxu0 0.0
        %884 = vmatprep.subr.mxu0 0.0
        %885 = vmatpush2.msra.mxu0 0.0
        %886 = vmatprep.subr.mxu0 0.0
        %887 = vmatpush2.msra.mxu0 0.0
        %888 = vmatprep.subr.mxu0 0.0
        %889 = vmatpush2.msra.mxu0 0.0
        %890 = vmatprep.subr.mxu0 0.0
        %891 = vmatpush2.msra.mxu0 0.0
        %892 = vmatprep.subr.mxu0 0.0
        %893 = vmatpush2.msra.mxu0 0.0
        %894 = vmatprep.subr.mxu0 0.0
        %895 = vmatpush2.msra.mxu0 0.0
        %896 = vmatprep.subr.mxu0 0.0
        %897 = vmatpush2.msra.mxu0 0.0
        %898 = vmatprep.subr.mxu0 0.0
        %899 = vmatpush2.msra.mxu0 0.0
        %900 = vmatprep.subr.mxu0 0.0
        %901 = vmatpush2.msra.mxu0 0.0
        %902 = vmatprep.subr.mxu0 0.0
        %903 = vmatpush2.msra.mxu0 0.0
        %904 = vmatprep.subr.mxu0 0.0
        %905 = vmatpush2.msra.mxu0 0.0
        %906 = vmatprep.subr.mxu0 0.0
        %907 = vmatpush2.msra.mxu0 0.0
        %908 = vmatprep.subr.mxu0 0.0
        %909 = vmatpush2.msra.mxu0 0.0
        %910 = vmatprep.mubr.f32.mxu0 0.0
        %911 = vmatmul.mubr.f32.gmra.mxu0 %v599
        %v912 = vpop.f32.mrf.mxu0
        %v913 = vadd.f32 %v843, %v912
        %v914 = vpop.f32.mrf.mxu0
        %915 = vdwg.mxu0
        %v916 = vld [vmem:[#allocation18] sm:$0xff]
        %v917 = vld [vmem:[#allocation18 + $0x8] sm:$0xff]
        %v918 = vld [vmem:[#allocation18 + $0x10] sm:$0xff]
        %v919 = vld [vmem:[#allocation18 + $0x18] sm:$0xff]
        %v920 = vld [vmem:[#allocation18 + $0x20] sm:$0xff]
        %v921 = vld [vmem:[#allocation18 + $0x28] sm:$0xff]
        %v922 = vld [vmem:[#allocation18 + $0x30] sm:$0xff]
        %v923 = vld [vmem:[#allocation18 + $0x38] sm:$0xff]
        %v924 = vld [vmem:[#allocation18 + $0x40] sm:$0xff]
        %v925 = vld [vmem:[#allocation18 + $0x48] sm:$0xff]
        %v926 = vld [vmem:[#allocation18 + $0x50] sm:$0xff]
        %v927 = vld [vmem:[#allocation18 + $0x58] sm:$0xff]
        %v928 = vld [vmem:[#allocation18 + $0x60] sm:$0xff]
        %v929 = vld [vmem:[#allocation18 + $0x68] sm:$0xff]
        %v930 = vld [vmem:[#allocation18 + $0x70] sm:$0xff]
        %v931 = vld [vmem:[#allocation18 + $0x78] sm:$0xff]
        %932 = vmatprep.subr.mxu0 0.0
        %933 = vmatpush1.msra.mxu0 %v931
        %934 = vmatprep.subr.mxu0 0.0
        %935 = vmatpush1.msra.mxu0 %v930
        %936 = vmatprep.subr.mxu0 0.0
        %937 = vmatpush1.msra.mxu0 %v929
        %938 = vmatprep.subr.mxu0 0.0
        %939 = vmatpush1.msra.mxu0 %v928
        %940 = vmatprep.subr.mxu0 0.0
        %941 = vmatpush1.msra.mxu0 %v927
        %942 = vmatprep.subr.mxu0 0.0
        %943 = vmatpush1.msra.mxu0 %v926
        %944 = vmatprep.subr.mxu0 0.0
        %945 = vmatpush1.msra.mxu0 %v925
        %946 = vmatprep.subr.mxu0 0.0
        %947 = vmatpush1.msra.mxu0 %v924
        %948 = vmatprep.subr.mxu0 0.0
        %949 = vmatpush1.msra.mxu0 %v923
        %950 = vmatprep.subr.mxu0 0.0
        %951 = vmatpush1.msra.mxu0 %v922
        %952 = vmatprep.subr.mxu0 0.0
        %953 = vmatpush1.msra.mxu0 %v921
        %954 = vmatprep.subr.mxu0 0.0
        %955 = vmatpush1.msra.mxu0 %v920
        %956 = vmatprep.subr.mxu0 0.0
        %957 = vmatpush1.msra.mxu0 %v919
        %958 = vmatprep.subr.mxu0 0.0
        %959 = vmatpush1.msra.mxu0 %v918
        %960 = vmatprep.subr.mxu0 0.0
        %961 = vmatpush1.msra.mxu0 %v917
        %962 = vmatprep.subr.mxu0 0.0
        %963 = vmatpush1.msra.mxu0 %v916
        %964 = vmatprep.subr.mxu0 0.0
        %965 = vmatpush2.msra.mxu0 0.0
        %966 = vmatprep.subr.mxu0 0.0
        %967 = vmatpush2.msra.mxu0 0.0
        %968 = vmatprep.subr.mxu0 0.0
        %969 = vmatpush2.msra.mxu0 0.0
        %970 = vmatprep.subr.mxu0 0.0
        %971 = vmatpush2.msra.mxu0 0.0
        %972 = vmatprep.subr.mxu0 0.0
        %973 = vmatpush2.msra.mxu0 0.0
        %974 = vmatprep.subr.mxu0 0.0
        %975 = vmatpush2.msra.mxu0 0.0
        %976 = vmatprep.subr.mxu0 0.0
        %977 = vmatpush2.msra.mxu0 0.0
        %978 = vmatprep.subr.mxu0 0.0
        %979 = vmatpush2.msra.mxu0 0.0
        %980 = vmatprep.subr.mxu0 0.0
        %981 = vmatpush2.msra.mxu0 0.0
        %982 = vmatprep.subr.mxu0 0.0
        %983 = vmatpush2.msra.mxu0 0.0
        %984 = vmatprep.subr.mxu0 0.0
        %985 = vmatpush2.msra.mxu0 0.0
        %986 = vmatprep.subr.mxu0 0.0
        %987 = vmatpush2.msra.mxu0 0.0
        %988 = vmatprep.subr.mxu0 0.0
        %989 = vmatpush2.msra.mxu0 0.0
        %990 = vmatprep.subr.mxu0 0.0
        %991 = vmatpush2.msra.mxu0 0.0
        %992 = vmatprep.subr.mxu0 0.0
        %993 = vmatpush2.msra.mxu0 0.0
        %994 = vmatprep.subr.mxu0 0.0
        %995 = vmatpush2.msra.mxu0 0.0
        %996 = vmatprep.mubr.f32.mxu0 0.0
        %997 = vmatmul.mubr.f32.gmra.mxu0 %v757
        %v998 = vpop.f32.mrf.mxu0
        %v999 = vadd.f32 0.0, %v998
        %v1000 = vpop.f32.mrf.mxu0
        %1001 = vdwg.mxu0
        %v1002 = vadd.f32 %v913, %v999
        %v1003 = vtanh.pop %v1002
        %1004 = vst [vmem:[#allocation2] sm:$0xff] %v1003
        %1005 = vst [vmem:[#allocation3] sm:$0xff] %v757
        %1006 = vst [vmem:[%s490] sm:$0xff] %v1003
        %1007 = vst [vmem:[%s497] sm:$0xff] %v757
        %s1008 = sand.u32 %s237, 1
        %s1009 = scalar_lea.sflag [#allocation6], %s1008
        %s1010 = sand.u32 %s237, 1
        %s1011 = smul.addr %s1010, 8
        %s1012 = scalar_lea.vmem [#allocation19], %s1011
        %s1013 = sand.u32 %s263, 1
        %s1014 = scalar_lea.sflag [#allocation21], %s1013
        %s1015 = sand.u32 %s263, 1
        %s1016 = smul.addr %s1015, 8
        %s1017 = scalar_lea.vmem [#allocation20], %s1016
        // Predicated region
        $region97: #{tpu_custom_call.1} parent=55 // pred_check
          %p1018 = pneg %p247
        $region98: #{tpu_custom_call.1} parent=55 // pred_check_branch
          %1020 = sbr.rel (%p1018) target = $region100
        $region99: #{tpu_custom_call.1} parent=55 // pred_region
          %s1022 = ssub.s32 128, 128
          %1023 = vsyncadd %s1009, %s1022
          %s1024 = smul.addr %s35, 128
          %s1025 = scalar_lea.hbm %s9, %s1024
          %s1027 = sshll.u32 %s1012, 4
          %s1028 = int_to_ptr.vmem [resolvable:$true] %s1027
          %1030 = dma.vmem_to_hbm [thread:$0]  %s1028, 128, %s1025, %s1009
        $region100: #{tpu_custom_call.1} parent=55 // pred_fallthru
          _
        // Predicated region
        $region101: #{tpu_custom_call.1} parent=55 // pred_check
          %p1031 = pneg %p273
        $region102: #{tpu_custom_call.1} parent=55 // pred_check_branch
          %1033 = sbr.rel (%p1031) target = $region104
        $region103: #{tpu_custom_call.1} parent=55 // pred_region
          %s1035 = ssub.s32 128, 128
          %1036 = vsyncadd %s1014, %s1035
          %s1037 = smul.addr %s35, 128
          %s1038 = scalar_lea.hbm %s10, %s1037
          %s1040 = sshll.u32 %s1017, 4
          %s1041 = int_to_ptr.vmem [resolvable:$true] %s1040
          %1043 = dma.vmem_to_hbm [thread:$0]  %s1041, 128, %s1038, %s1014
        $region104: #{tpu_custom_call.1} parent=55 // pred_fallthru
          _
      $region56: #{tpu_custom_call.1} parent=5 // pred_fallthru
        _
      %p1044 = scmp.le.s32.totalorder 2, %s30
      // Predicated region
      $region105: #{tpu_custom_call.1} parent=5 // pred_check
        %p1045 = pneg %p1044
      $region106: #{tpu_custom_call.1} parent=5 // pred_check_branch
        %1047 = sbr.rel (%p1045) target = $region108
      $region107: #{tpu_custom_call.1} parent=5 // pred_region
        %s1048 = ssub.s32 %s30, 2
        // Predicated region
        $region109: #{tpu_custom_call.1} parent=107 // pred_check
          %p1049 = pneg %p253
        $region110: #{tpu_custom_call.1} parent=107 // pred_check_branch
          %1051 = sbr.rel (%p1049) target = $region112
        $region111: #{tpu_custom_call.1} parent=107 // pred_region
          %s1052 = sand.u32 %s238, 1
          %s1053 = scalar_lea.sflag [#allocation6], %s1052
          %s1054 = sand.u32 %s238, 1
          %s1055 = smul.addr %s1054, 8
          %s1056 = scalar_lea.vmem [#allocation19], %s1055
          %1057 = dma.done %s1053, 128
        $region112: #{tpu_custom_call.1} parent=107 // pred_fallthru
          _
        // Predicated region
        $region113: #{tpu_custom_call.1} parent=107 // pred_check
          %p1058 = pneg %p279
        $region114: #{tpu_custom_call.1} parent=107 // pred_check_branch
          %1060 = sbr.rel (%p1058) target = $region116
        $region115: #{tpu_custom_call.1} parent=107 // pred_region
          %s1061 = sand.u32 %s264, 1
          %s1062 = scalar_lea.sflag [#allocation21], %s1061
          %s1063 = sand.u32 %s264, 1
          %s1064 = smul.addr %s1063, 8
          %s1065 = scalar_lea.vmem [#allocation20], %s1064
          %1066 = dma.done %s1062, 128
        $region116: #{tpu_custom_call.1} parent=107 // pred_fallthru
          _
      $region108: #{tpu_custom_call.1} parent=5 // pred_fallthru
        _
    $region6: #{tpu_custom_call.1} parent=1 // loop_footer
      %s34 = sadd.s32 1, %s30
    $region7: #{tpu_custom_call.1} parent=1 // loop_footer_branch
      %29 = sbr.rel target = $region3
    $region8: #{tpu_custom_call.1} parent=1 // loop_exit
      _
    %1067 = vsyncpa [#allocation5], 1
    %s1068 = scalar_lea.sflag [#allocation5], 1
    %1069 = vsyncpa %s1068, 1
    %1070 = vsyncpa [#allocation8], 1
    %1071 = vsyncpa [#allocation11], 1
    %1072 = vsyncpa [#allocation14], 1
    %1073 = vsyncpa [#allocation17], 1
    %1074 = vsyncpa [#allocation6], 1
    %s1075 = scalar_lea.sflag [#allocation6], 1
    %1076 = vsyncpa %s1075, 1
    %1077 = vsyncpa [#allocation21], 1
    %s1078 = scalar_lea.sflag [#allocation21], 1
    %1079 = vsyncpa %s1078, 1

</llo_original>
